<compile_context>
chip_gen: v7x
topology: tpu7x:2x2x1
jax: 0.10.0
libtpu: 0.0.40
codegen_flags: <defaults>
</compile_context>

<pallas_src>
import functools

import jax
import jax.numpy as jnp
import numpy as np
from jax.experimental import pallas as pl
from jax.experimental.pallas import tpu as pltpu

_LANES = 128


def _lane_chunk_sum(val, acc_dtype=jnp.float32):
    """Sum a (R, THW) tile over the spatial axis into an (R, 128) partial sum
    using only lane-aligned static slices + VPU adds (no XLU reduce)."""
    _, thw = val.shape
    part = val[:, 0:_LANES].astype(acc_dtype)
    for t in range(1, thw // _LANES):
        part = part + val[:, t * _LANES:(t + 1) * _LANES].astype(acc_dtype)
    return part


def _cam_kernel(x_ref, w_ref, cam_ref, logits_ref, acc_ref, *, inv_hw):
    """with_cam=True head for one (batch, spatial-chunk, spatial-tile) point.

    x_ref:      (1, C, THW)     feature tile (NCHW kept; lane dim = spatial)
    w_ref:      (K, C)          1x1-conv weight (lane-dense C)
    cam_ref:    (1, K, THW)     CAM tile (lane-dense spatial -> unmasked vst)
    logits_ref: (1, 1, K, 1)    f32 partial GAP logits for this spatial chunk
    acc_ref:    (K, 128) f32    lane-chunk partial-sum accumulator
    """
    si = pl.program_id(2)

    @pl.when(si == 0)
    def _():
        acc_ref[...] = jnp.zeros_like(acc_ref)

    x = x_ref[0]                                                        # (C, THW)
    cam = jnp.dot(w_ref[...], x, preferred_element_type=jnp.float32)    # (K, THW)
    cam_ref[0] = cam.astype(cam_ref.dtype)

    # Hot loop = DMA + MXU + store + a few VPU adds; the cross-lane (XLU)
    # reduce is deferred to the finalize.
    acc_ref[...] += _lane_chunk_sum(cam)

    @pl.when(si == pl.num_programs(2) - 1)
    def _():
        logits_ref[0, 0] = (jnp.sum(acc_ref[...], axis=1, keepdims=True)
                            * inv_hw).astype(logits_ref.dtype)


def _nocam_kernel(x_ref, w_ref, logits_ref, acc_ref, *, inv_hw):
    """with_cam=False head: stream x tiles, accumulate per-channel lane-chunk
    sums on the VPU, then a single XLU reduce + tiny (K,C)x(C,1) dot at the end.

    x_ref: (1, C, THW)   w_ref: (K, C)   logits_ref: (1, 1, K, 1) f32
    acc_ref: (C, 128) f32 lane-chunk partial-sum accumulator
    """
    si = pl.program_id(2)

    @pl.when(si == 0)
    def _():
        acc_ref[...] = jnp.zeros_like(acc_ref)

    acc_ref[...] += _lane_chunk_sum(x_ref[0])

    @pl.when(si == pl.num_programs(2) - 1)
    def _():
        pooled = jnp.sum(acc_ref[...], axis=1, keepdims=True) * inv_hw   # (C, 1)
        logits = jnp.dot(w_ref[...].astype(jnp.float32), pooled,
                         preferred_element_type=jnp.float32)             # (K, 1)
        logits_ref[0, 0] = logits.astype(logits_ref.dtype)


def _vmem_limit_bytes():
    phys = 64 * 1024 * 1024
    try:
        phys = int(pltpu.get_tpu_info().vmem_capacity_bytes)
    except Exception:
        pass
    # ~48 MiB scoped on v7x (64 MiB physical), ~96 MiB on v5e/v6e (128 MiB).
    return int(min(96 * 1024 * 1024, (phys * 3) // 4))


def _pick_spatial_tile(hw_pad, c, k, itemsize, with_cam, vmem_limit):
    """Largest lane-aligned spatial tile dividing hw_pad that keeps the
    double-buffered working set comfortably inside the scoped VMEM limit."""
    budget = int(vmem_limit * 0.6)
    fixed = c * _LANES * 4 + k * c * 4 + (1 << 16)   # accumulator + weight + slack
    for cand in (2048, 1024, 512, 256, 128):
        if hw_pad % cand:
            continue
        per_step = 2 * c * cand * itemsize           # double-buffered feature tile
        if with_cam:
            per_step += 2 * k * cand * itemsize      # double-buffered CAM tile
        if fixed + per_step <= budget:
            return cand
    return 128   # hw_pad is always a multiple of 128


def classifier_effnet_forward(features_nchw, classifier_weight, with_cam=False,
                              spatial_tile=None):
    """Pallas head of Classifier_EffNet.

    features_nchw:     [N, C, H, W]  output of enet.extract_features.
    classifier_weight: [K, C, 1, 1]  bias-free 1x1-conv weight.
    Returns f32 logits [N, K] (and the CAM feature map [N, K, H, W] in the
    feature dtype when with_cam=True).
    """
    n, c, h, w = features_nchw.shape
    k = classifier_weight.shape[0]
    hw = h * w
    hw_pad = ((hw + _LANES - 1) // _LANES) * _LANES
    inv_hw = 1.0 / float(hw)
    in_dtype = features_nchw.dtype
    itemsize = jnp.dtype(in_dtype).itemsize

    # NCHW kept as-is (free reshape); zero-pad spatial axis to a lane multiple
    # so CAM stores stay unmasked and the grid keeps pipelinable steps.
    x = features_nchw.reshape(n, c, hw)
    if hw_pad != hw:
        x = jnp.pad(x, ((0, 0), (0, 0), (0, hw_pad - hw)))
    w_kc = classifier_weight.reshape(k, c).astype(in_dtype)

    vmem_limit = _vmem_limit_bytes()
    thw = (spatial_tile if spatial_tile is not None
           else _pick_spatial_tile(hw_pad, c, k, itemsize, with_cam, vmem_limit))
    assert hw_pad % thw == 0, "spatial tile must divide padded H*W"
    n_tiles = hw_pad // thw
    # Split spatial tiles into two independent "parallel" chunks so v7x's
    # second TensorCore gets work even at batch 1; harmless on 1-TC chips.
    s_outer = 2 if n_tiles % 2 == 0 else 1
    s_inner = n_tiles // s_outer
    grid = (n, s_outer, s_inner)

    compiler_params = pltpu.CompilerParams(
        dimension_semantics=("parallel", "parallel", "arbitrary"),
        vmem_limit_bytes=vmem_limit,
    )

    x_spec = pl.BlockSpec((1, c, thw), lambda i, so, si: (i, 0, so * s_inner + si))
    w_spec = pl.BlockSpec((k, c), lambda i, so, si: (0, 0))
    logits_spec = pl.BlockSpec((1, 1, k, 1), lambda i, so, si: (i, so, 0, 0))
    logits_shape = jax.ShapeDtypeStruct((n, s_outer, k, 1), jnp.float32)

    if with_cam:
        cost = pl.CostEstimate(
            flops=2 * n * hw_pad * c * k,
            transcendentals=0,
            bytes_accessed=(n * hw_pad * c * itemsize + n * hw_pad * k * itemsize
                            + k * c * itemsize + n * s_outer * k * 4),
        )
        cam, logits_part = pl.pallas_call(
            functools.partial(_cam_kernel, inv_hw=inv_hw),
            out_shape=(
                jax.ShapeDtypeStruct((n, k, hw_pad), in_dtype),   # CAM (NCHW-flat)
                logits_shape,                                     # f32 partial logits
            ),
            grid=grid,
            in_specs=[x_spec, w_spec],
            out_specs=(
                pl.BlockSpec((1, k, thw), lambda i, so, si: (i, 0, so * s_inner + si)),
                logits_spec,
            ),
            scratch_shapes=[pltpu.VMEM((k, _LANES), jnp.float32)],
            compiler_params=compiler_params,
            cost_estimate=cost,
        )(x, w_kc)
        logits = jnp.sum(logits_part, axis=1).reshape(n, k)        # tiny wrapper sum
        cam = cam[:, :, :hw].reshape(n, k, h, w)
        return logits, cam
    else:
        cost = pl.CostEstimate(
            flops=n * hw_pad * c + 2 * n * s_outer * c * k,
            transcendentals=0,
            bytes_accessed=(n * hw_pad * c * itemsize + k * c * itemsize
                            + n * s_outer * k * 4),
        )
        logits_part = pl.pallas_call(
            functools.partial(_nocam_kernel, inv_hw=inv_hw),
            out_shape=logits_shape,
            grid=grid,
            in_specs=[x_spec, w_spec],
            out_specs=logits_spec,
            scratch_shapes=[pltpu.VMEM((c, _LANES), jnp.float32)],
            compiler_params=compiler_params,
            cost_estimate=cost,
        )(x, w_kc)
        return jnp.sum(logits_part, axis=1).reshape(n, k)


def _reference(features, w_cls):
    k, c = w_cls.shape[0], w_cls.shape[1]
    w2d = w_cls.reshape(k, c).astype(jnp.float32)
    cam = jnp.einsum("kc,nchw->nkhw", w2d, features.astype(jnp.float32))
    logits = jnp.mean(cam, axis=(2, 3))
    return logits, cam


if __name__ == "__main__":
    key = jax.random.PRNGKey(0)
    k_feat, k_w, k_feat2, k_w2 = jax.random.split(key, 4)

    # ---- Tests 1/2: lane-aligned map (H*W = 1024), f32 --------------------
    N, C, H, W = 2, 128, 32, 32
    K = 19
    features = jax.random.normal(k_feat, (N, C, H, W), dtype=jnp.float32)
    w_cls = jax.random.normal(k_w, (K, C, 1, 1), dtype=jnp.float32) * jnp.sqrt(2.0 / C)

    logits_ref, cam_ref = _reference(features, w_cls)

    # default (large) tile: single spatial step
    logits_cam, cam = classifier_effnet_forward(features, w_cls, with_cam=True)
    logits = classifier_effnet_forward(features, w_cls, with_cam=False)
    # forced 256-wide tile: exercises cross-tile accumulation + 2-way spatial split
    logits_cam_t, cam_t = classifier_effnet_forward(features, w_cls, with_cam=True,
                                                    spatial_tile=256)
    logits_t = classifier_effnet_forward(features, w_cls, with_cam=False,
                                         spatial_tile=256)
    jax.block_until_ready((logits_cam, cam, logits, logits_cam_t, cam_t, logits_t))

    for lg, cm in ((logits_cam, cam), (logits_cam_t, cam_t)):
        np.testing.assert_allclose(np.asarray(cm), np.asarray(cam_ref),
                                   rtol=1e-4, atol=1e-4)
        np.testing.assert_allclose(np.asarray(lg), np.asarray(logits_ref),
                                   rtol=1e-4, atol=1e-4)
    np.testing.assert_allclose(np.asarray(logits), np.asarray(logits_ref),
                               rtol=1e-4, atol=1e-4)
    np.testing.assert_allclose(np.asarray(logits_t), np.asarray(logits_ref),
                               rtol=1e-4, atol=1e-4)

    # ---- Test 3: ragged EfficientNet-style map (7x7 = 49 -> padded to 128) -
    N2, C2, H2, W2 = 1, 96, 7, 7
    feats_r = jax.random.normal(k_feat2, (N2, C2, H2, W2), dtype=jnp.float32)
    w_r = jax.random.normal(k_w2, (K, C2, 1, 1), dtype=jnp.float32) * jnp.sqrt(2.0 / C2)
    logits_ref_r, cam_ref_r = _reference(feats_r, w_r)
    logits_r_cam, cam_r = classifier_effnet_forward(feats_r, w_r, with_cam=True)
    logits_r = classifier_effnet_forward(feats_r, w_r, with_cam=False)
    jax.block_until_ready((logits_r_cam, cam_r, logits_r))
    np.testing.assert_allclose(np.asarray(cam_r), np.asarray(cam_ref_r),
                               rtol=1e-4, atol=1e-4)
    np.testing.assert_allclose(np.asarray(logits_r_cam), np.asarray(logits_ref_r),
                               rtol=1e-4, atol=1e-4)
    np.testing.assert_allclose(np.asarray(logits_r), np.asarray(logits_ref_r),
                               rtol=1e-4, atol=1e-4)

    # ---- Test 4: bf16 feature streaming (half HBM traffic), f32 logits -----
    feats_b = features.astype(jnp.bfloat16)
    w_b = w_cls.astype(jnp.bfloat16)
    logits_ref_b, cam_ref_b = _reference(feats_b, w_b)
    logits_b, cam_b = classifier_effnet_forward(feats_b, w_b, with_cam=True,
                                                spatial_tile=256)
    jax.block_until_ready((logits_b, cam_b))
    assert logits_b.dtype == jnp.float32
    np.testing.assert_allclose(np.asarray(cam_b.astype(jnp.float32)),
                               np.asarray(cam_ref_b), rtol=5e-2, atol=5e-2)
    np.testing.assert_allclose(np.asarray(logits_b), np.asarray(logits_ref_b),
                               rtol=2e-2, atol=2e-2)

    print("KERNEL_OK")
</pallas_src>

<mosaic_0001>
module attributes {stable_mosaic.version = 11 : i64} {
  func.func @_cam_kernel(%arg0: i32, %arg1: i32, %arg2: i32, %arg3: memref<1x128x1024xf32, #tpu.memory_space<vmem>>, %arg4: memref<19x128xf32, #tpu.memory_space<vmem>>, %arg5: memref<1x19x1024xf32, #tpu.memory_space<vmem>>, %arg6: memref<1x1x19x1xf32, #tpu.memory_space<vmem>>, %arg7: memref<19x128xf32, #tpu.memory_space<vmem>>) attributes {dimension_semantics = [#tpu.dimension_semantics<parallel>, #tpu.dimension_semantics<parallel>, #tpu.dimension_semantics<arbitrary>], iteration_bounds = array<i64: 2, 1, 1>, scalar_prefetch = 0 : i64, scratch_operands = 1 : i64, tpu.core_type = #tpu.core_type<tc>, window_params = [{transform_indices = @transform_0, window_bounds = array<i64: 1, 128, 1024>}, {pipeline_mode = #tpu.pipeline_mode<synchronous>, transform_indices = @transform_1, window_bounds = array<i64: 19, 128>}, {transform_indices = @transform_2, window_bounds = array<i64: 1, 19, 1024>}, {transform_indices = @transform_3, window_bounds = array<i64: 1, 1, 19, 1>}]} {
    %c0_i32 = arith.constant 0 : i32
    %0 = arith.cmpi eq, %arg2, %c0_i32 : i32
    %1 = arith.extui %0 : i1 to i32
    %c0_i32_0 = arith.constant 0 : i32
    %2 = arith.cmpi ne, %1, %c0_i32_0 : i32
    scf.if %2 {
      %cst_14 = arith.constant 0.000000e+00 : f32
      %31 = vector.broadcast %cst_14 : f32 to vector<19x128xf32>
      %c0_15 = arith.constant 0 : index
      %c0_16 = arith.constant 0 : index
      %32 = vector.load %arg7[%c0_15, %c0_16] : memref<19x128xf32, #tpu.memory_space<vmem>>, vector<19x128xf32>
      tpu.vector_store %arg7[%c0_15, %c0_16], %31 {strides = array<i32>} : memref<19x128xf32, #tpu.memory_space<vmem>>, vector<19x128xf32>,
    } else {
    }
    %c0 = arith.constant 0 : index
    %c0_1 = arith.constant 0 : index
    %c0_2 = arith.constant 0 : index
    %3 = vector.load %arg3[%c0, %c0_1, %c0_2] : memref<1x128x1024xf32, #tpu.memory_space<vmem>>, vector<1x128x1024xf32>
    %4 = vector.shape_cast %3 : vector<1x128x1024xf32> to vector<128x1024xf32>
    %c0_3 = arith.constant 0 : index
    %c0_4 = arith.constant 0 : index
    %5 = vector.load %arg4[%c0_3, %c0_4] : memref<19x128xf32, #tpu.memory_space<vmem>>, vector<19x128xf32>
    %cst = arith.constant dense<0.000000e+00> : vector<19x1024xf32>
    %6 = tpu.matmul %5, %4, %cst {dimension_numbers = #tpu.dot_dimension_numbers<[1], [0], [0], [1], [0, 0, 1, 1], [], []>} : vector<19x128xf32>, vector<128x1024xf32>, vector<19x1024xf32> -> vector<19x1024xf32>
    %c0_5 = arith.constant 0 : index
    %c0_6 = arith.constant 0 : index
    %c0_7 = arith.constant 0 : index
    %7 = vector.load %arg5[%c0_5, %c0_6, %c0_7] : memref<1x19x1024xf32, #tpu.memory_space<vmem>>, vector<1x19x1024xf32>
    %8 = vector.shape_cast %7 : vector<1x19x1024xf32> to vector<19x1024xf32>
    %9 = vector.shape_cast %6 : vector<19x1024xf32> to vector<1x19x1024xf32>
    tpu.vector_store %arg5[%c0_5, %c0_6, %c0_7], %9 {strides = array<i32>} : memref<1x19x1024xf32, #tpu.memory_space<vmem>>, vector<1x19x1024xf32>,
    %c0_8 = arith.constant 0 : index
    %c0_9 = arith.constant 0 : index
    %10 = vector.load %arg7[%c0_8, %c0_9] : memref<19x128xf32, #tpu.memory_space<vmem>>, vector<19x128xf32>
    %11 = vector.extract_strided_slice %6 {offsets = [0, 0], sizes = [19, 128], strides = [1, 1]} : vector<19x1024xf32> to vector<19x128xf32>
    %12 = vector.extract_strided_slice %6 {offsets = [0, 128], sizes = [19, 128], strides = [1, 1]} : vector<19x1024xf32> to vector<19x128xf32>
    %13 = arith.addf %11, %12 : vector<19x128xf32>
    %14 = vector.extract_strided_slice %6 {offsets = [0, 256], sizes = [19, 128], strides = [1, 1]} : vector<19x1024xf32> to vector<19x128xf32>
    %15 = arith.addf %13, %14 : vector<19x128xf32>
    %16 = vector.extract_strided_slice %6 {offsets = [0, 384], sizes = [19, 128], strides = [1, 1]} : vector<19x1024xf32> to vector<19x128xf32>
    %17 = arith.addf %15, %16 : vector<19x128xf32>
    %18 = vector.extract_strided_slice %6 {offsets = [0, 512], sizes = [19, 128], strides = [1, 1]} : vector<19x1024xf32> to vector<19x128xf32>
    %19 = arith.addf %17, %18 : vector<19x128xf32>
    %20 = vector.extract_strided_slice %6 {offsets = [0, 640], sizes = [19, 128], strides = [1, 1]} : vector<19x1024xf32> to vector<19x128xf32>
    %21 = arith.addf %19, %20 : vector<19x128xf32>
    %22 = vector.extract_strided_slice %6 {offsets = [0, 768], sizes = [19, 128], strides = [1, 1]} : vector<19x1024xf32> to vector<19x128xf32>
    %23 = arith.addf %21, %22 : vector<19x128xf32>
    %24 = vector.extract_strided_slice %6 {offsets = [0, 896], sizes = [19, 128], strides = [1, 1]} : vector<19x1024xf32> to vector<19x128xf32>
    %25 = arith.addf %23, %24 : vector<19x128xf32>
    %26 = arith.addf %10, %25 : vector<19x128xf32>
    %c0_10 = arith.constant 0 : index
    %c0_11 = arith.constant 0 : index
    %27 = vector.load %arg7[%c0_10, %c0_11] : memref<19x128xf32, #tpu.memory_space<vmem>>, vector<19x128xf32>
    tpu.vector_store %arg7[%c0_10, %c0_11], %26 {strides = array<i32>} : memref<19x128xf32, #tpu.memory_space<vmem>>, vector<19x128xf32>,
    %c0_i32_12 = arith.constant 0 : i32
    %28 = arith.cmpi eq, %arg2, %c0_i32_12 : i32
    %29 = arith.extui %28 : i1 to i32
    %c0_i32_13 = arith.constant 0 : i32
    %30 = arith.cmpi ne, %29, %c0_i32_13 : i32
    scf.if %30 {
      %c0_14 = arith.constant 0 : index
      %c0_15 = arith.constant 0 : index
      %31 = vector.load %arg7[%c0_14, %c0_15] : memref<19x128xf32, #tpu.memory_space<vmem>>, vector<19x128xf32>
      %cst_16 = arith.constant dense<0.000000e+00> : vector<19xf32>
      %32 = vector.multi_reduction <add>, %31, %cst_16 [1] : vector<19x128xf32> to vector<19xf32>
      %33 = vector.shape_cast %32 : vector<19xf32> to vector<19x1xf32>
      %cst_17 = arith.constant 9.765625E-4 : f32
      %34 = vector.broadcast %cst_17 : f32 to vector<19x1xf32>
      %35 = arith.mulf %33, %34 : vector<19x1xf32>
      %c0_18 = arith.constant 0 : index
      %c0_19 = arith.constant 0 : index
      %c0_20 = arith.constant 0 : index
      %c0_21 = arith.constant 0 : index
      %36 = vector.load %arg6[%c0_18, %c0_19, %c0_20, %c0_21] : memref<1x1x19x1xf32, #tpu.memory_space<vmem>>, vector<1x1x19x1xf32>
      %37 = vector.shape_cast %36 : vector<1x1x19x1xf32> to vector<19x1xf32>
      %38 = vector.shape_cast %35 : vector<19x1xf32> to vector<1x1x19x1xf32>
      tpu.vector_store %arg6[%c0_18, %c0_19, %c0_20, %c0_21], %38 {strides = array<i32>} : memref<1x1x19x1xf32, #tpu.memory_space<vmem>>, vector<1x1x19x1xf32>,
    } else {
    }
    return
  }
  func.func @transform_0(%arg0: i32, %arg1: i32, %arg2: i32) -> (i32, i32, i32) {
    %c1_i32 = arith.constant 1 : i32
    %0 = arith.muli %arg1, %c1_i32 : i32
    %1 = arith.addi %0, %arg2 : i32
    %c0_i32 = arith.constant 0 : i32
    %c0_i32_0 = arith.constant 0 : i32
    return %arg0, %c0_i32, %1 : i32, i32, i32
  }
  func.func @transform_1(%arg0: i32, %arg1: i32, %arg2: i32) -> (i32, i32) {
    %c0_i32 = arith.constant 0 : i32
    %c0_i32_0 = arith.constant 0 : i32
    %c0_i32_1 = arith.constant 0 : i32
    return %c0_i32, %c0_i32_0 : i32, i32
  }
  func.func @transform_2(%arg0: i32, %arg1: i32, %arg2: i32) -> (i32, i32, i32) {
    %c1_i32 = arith.constant 1 : i32
    %0 = arith.muli %arg1, %c1_i32 : i32
    %1 = arith.addi %0, %arg2 : i32
    %c0_i32 = arith.constant 0 : i32
    %c0_i32_0 = arith.constant 0 : i32
    return %arg0, %c0_i32, %1 : i32, i32, i32
  }
  func.func @transform_3(%arg0: i32, %arg1: i32, %arg2: i32) -> (i32, i32, i32, i32) {
    %c0_i32 = arith.constant 0 : i32
    %c0_i32_0 = arith.constant 0 : i32
    %c0_i32_1 = arith.constant 0 : i32
    return %arg0, %arg1, %c0_i32, %c0_i32_0 : i32, i32, i32, i32
  }
}

</mosaic_0001>

<llo_original>
// kernel: tpu_custom_call.1
$region0: #{tpu_custom_call.1}
  #allocation0 [shape = 'u32[]', space=smem, size = 0x4, offset = 0x4, fixed_abs, tag = 'smem constant byte address 0x4 - core index']
  #allocation1 [shape = 'u32[144,128]{1,0:T(1,128)}', space=vmem, size = 0x12000, scoped, tag = 'internal scratch']
  #allocation2 [shape = 'f32[19,128]{1,0:T(8,128)}', space=vmem, size = 0x3000, scoped, tag = 'scratch operand']
  %s0 = inlined_call_operand.hbm [shape: f32[2,128,1024], index: 0, kind: input, shape index: {}]
  %s1 = inlined_call_operand.hbm [shape: f32[19,128], index: 1, kind: input, shape index: {}]
  %s2 = inlined_call_operand.vmem [shape: f32[2,19,1024], index: 2, kind: output, shape index: {0}]
  %s3 = inlined_call_operand.vmem [shape: f32[2,1,19,1], index: 3, kind: output, shape index: {1}]
  %4 = xla_tuple %s2, %s3
  %s5 = sld [smem:[#allocation0]]
  $region65: #{tpu_custom_call.1} parent=0
    _
  %s7 = ssub.s32 1, %s5
  %s8 = scalar_select 0, %s7, %s5
  $region1: #{tpu_custom_call.1} parent=0
    #allocation3 [shape = 'u8[1048576]{0}', space=vmem, size = 0x100000, scoped, tag = 'input window, operand 0']
    #allocation4 [shape = 's32[2]{0}', space=sflag, size = 0x8, scoped, tag = 'scoped memory for tpu_custom_call.1']
    #allocation5 [shape = 'u8[12288]{0}', space=vmem, size = 0x3000, scoped, tag = 'input window, operand 1, single buffered']
    #allocation6 [shape = 's32[1]{0}', space=sflag, size = 0x4, scoped, tag = 'scoped memory for tpu_custom_call.1']
    %9 = vsyncpa [#allocation4], 0
    %s10 = scalar_lea.sflag [#allocation4], 1
    %11 = vsyncpa %s10, 0
    %12 = vsyncpa [#allocation6], 0
    loop: start=0, step=1, limit=4
    $region2: #{tpu_custom_call.1} parent=1 // loop_pre_header
      _
    $region3: #{tpu_custom_call.1} parent=1 // loop_header
      %s14 = sphi 0, %s18
      %p15 = scmp.ge.s32.totalorder %s14, 4
      %s21 = sphi 0, %s40
      %s22 = sphi 0, %s36
      %s23 = sphi 0, %s32
      %s24 = sphi 0, %s21
      %s25 = sphi 0, %s22
      %s26 = sphi 0, %s23
      %s27 = sphi 0, %s24
      %s28 = sphi 0, %s25
      %s29 = sphi 0, %s26
      %s47 = sphi 0, %s49
      %s50 = sphi 0, %s47
      %s51 = sphi 0, %s50
      %s67 = sphi 0, %s51
      %s71 = sphi 0, %s71
      %s73 = sphi 0, %s71
      %s74 = sphi 0, %s73
      %s88 = sphi 0, %s74
      %s98 = sphi 0, %s100
      %s101 = sphi 0, %s98
      %s102 = sphi 0, %s101
      %s118 = sphi 0, %s102
      %s126 = sphi 0, %s128
      %s129 = sphi 0, %s126
      %s130 = sphi 0, %s129
      %s146 = sphi 0, %s130
    $region4: #{tpu_custom_call.1} parent=1 // loop_header_branch
      %17 = sbr.rel (%p15) target = $region8
    $region5: #{tpu_custom_call.1} parent=1 // loop_body
      %s19 = ssub.s32 %s14, 1
      %s20 = ssub.s32 %s14, 2
      %s30 = sadd.s32 1, %s23
      %p31 = scmp.ge.s32.totalorder %s30, 1
      %s32 = scalar_select %p31, 0, %s30
      %s33 = sadd.s32 1, %s22
      %s34 = scalar_select %p31, %s33, %s22
      %p35 = scmp.ge.s32.totalorder %s34, 1
      %s36 = scalar_select %p35, 0, %s34
      %s37 = sadd.s32 1, %s21
      %s38 = scalar_select %p35, %s37, %s21
      %p39 = scmp.ge.s32.totalorder %s38, 2
      %s40 = scalar_select %p39, 0, %s38
      %s41 = sadd.s32 %s22, %s23
      %s42 = sadd.s32 %s36, %s32
      %s43 = ssub.s32 %s21, %s40
      %s44 = ssub.s32 %s41, %s42
      %s45 = sor.u32 %s43, %s44
      %p46 = scmp.eq.s32.totalorder %s45, 0
      %s48 = sadd.s32 %s47, 1
      %s49 = scalar_select %p46, %s47, %s48
      %p52 = pneg %p46
      %p53 = scmp.eq.s32.totalorder %s14, 1
      %p54 = por %p52, %p53
      %p55 = scmp.ne.s32.totalorder %s47, %s50
      %p56 = scmp.eq.s32.totalorder %s14, 0
      %p57 = por %p55, %p56
      %p58 = scmp.ne.s32.totalorder %s47, %s50
      %p59 = scmp.eq.s32.totalorder %s19, 1
      %p60 = por %p58, %p59
      %p61 = scmp.ne.s32.totalorder %s50, %s51
      %p62 = scmp.eq.s32.totalorder %s19, 0
      %p63 = por %p61, %p62
      %p64 = scmp.ne.s32.totalorder %s50, %s51
      %p65 = scmp.eq.s32.totalorder %s20, 1
      %p66 = por %p64, %p65
      %p68 = scmp.ne.s32.totalorder %s51, %s67
      %p69 = scmp.eq.s32.totalorder %s20, 0
      %p70 = por %p68, %p69
      %s72 = sadd.s32 %s71, 1
      %p75 = scmp.eq.s32.totalorder %s14, 1
      %p76 = scmp.ne.s32.totalorder %s71, %s73
      %p77 = scmp.eq.s32.totalorder %s14, 0
      %p78 = por %p76, %p77
      %p79 = scmp.ne.s32.totalorder %s71, %s73
      %p80 = scmp.eq.s32.totalorder %s19, 1
      %p81 = por %p79, %p80
      %p82 = scmp.ne.s32.totalorder %s73, %s74
      %p83 = scmp.eq.s32.totalorder %s19, 0
      %p84 = por %p82, %p83
      %p85 = scmp.ne.s32.totalorder %s73, %s74
      %p86 = scmp.eq.s32.totalorder %s20, 1
      %p87 = por %p85, %p86
      %p89 = scmp.ne.s32.totalorder %s74, %s88
      %p90 = scmp.eq.s32.totalorder %s20, 0
      %p91 = por %p89, %p90
      %s92 = sadd.s32 %s22, %s23
      %s93 = sadd.s32 %s36, %s32
      %s94 = ssub.s32 %s21, %s40
      %s95 = ssub.s32 %s92, %s93
      %s96 = sor.u32 %s94, %s95
      %p97 = scmp.eq.s32.totalorder %s96, 0
      %s99 = sadd.s32 %s98, 1
      %s100 = scalar_select %p97, %s98, %s99
      %p103 = pneg %p97
      %p104 = scmp.eq.s32.totalorder %s14, 1
      %p105 = por %p103, %p104
      %p106 = scmp.ne.s32.totalorder %s98, %s101
      %p107 = scmp.eq.s32.totalorder %s14, 0
      %p108 = por %p106, %p107
      %p109 = scmp.ne.s32.totalorder %s98, %s101
      %p110 = scmp.eq.s32.totalorder %s19, 1
      %p111 = por %p109, %p110
      %p112 = scmp.ne.s32.totalorder %s101, %s102
      %p113 = scmp.eq.s32.totalorder %s19, 0
      %p114 = por %p112, %p113
      %p115 = scmp.ne.s32.totalorder %s101, %s102
      %p116 = scmp.eq.s32.totalorder %s20, 1
      %p117 = por %p115, %p116
      %p119 = scmp.ne.s32.totalorder %s102, %s118
      %p120 = scmp.eq.s32.totalorder %s20, 0
      %p121 = por %p119, %p120
      %s122 = ssub.s32 %s21, %s40
      %s123 = ssub.s32 %s22, %s36
      %s124 = sor.u32 %s122, %s123
      %p125 = scmp.eq.s32.totalorder %s124, 0
      %s127 = sadd.s32 %s126, 1
      %s128 = scalar_select %p125, %s126, %s127
      %p131 = pneg %p125
      %p132 = scmp.eq.s32.totalorder %s14, 1
      %p133 = por %p131, %p132
      %p134 = scmp.ne.s32.totalorder %s126, %s129
      %p135 = scmp.eq.s32.totalorder %s14, 0
      %p136 = por %p134, %p135
      %p137 = scmp.ne.s32.totalorder %s126, %s129
      %p138 = scmp.eq.s32.totalorder %s19, 1
      %p139 = por %p137, %p138
      %p140 = scmp.ne.s32.totalorder %s129, %s130
      %p141 = scmp.eq.s32.totalorder %s19, 0
      %p142 = por %p140, %p141
      %p143 = scmp.ne.s32.totalorder %s129, %s130
      %p144 = scmp.eq.s32.totalorder %s20, 1
      %p145 = por %p143, %p144
      %p147 = scmp.ne.s32.totalorder %s130, %s146
      %p148 = scmp.eq.s32.totalorder %s20, 0
      %p149 = por %p147, %p148
      %p150 = scmp.le.s32.totalorder 1, %s14
      %p151 = scmp.lt.s32.totalorder %s14, 3
      %p152 = pnand %p150, %p151
      %p153 = pneg %p152
      // Predicated region
      $region9: #{tpu_custom_call.1} parent=5 // pred_check
        _
      $region10: #{tpu_custom_call.1} parent=5 // pred_check_branch
        %155 = sbr.rel (%p152) target = $region12
      $region11: #{tpu_custom_call.1} parent=5 // pred_region
        %s156 = ssub.s32 %s14, 1
        // Predicated region
        $region13: #{tpu_custom_call.1} parent=11 // pred_check
          %p157 = pneg %p84
        $region14: #{tpu_custom_call.1} parent=11 // pred_check_branch
          %159 = sbr.rel (%p157) target = $region16
        $region15: #{tpu_custom_call.1} parent=11 // pred_region
          %s161 = ssub.s32 384, 384
          %162 = vsyncadd [#allocation6], %s161
          %s163 = sshll.u32 [#allocation5], 4
          %s164 = int_to_ptr.vmem [resolvable:$true] %s163
          %169 = dma.hbm_to_vmem [thread:$0]  %s1, 384, %s164, [#allocation6], 128, 128, 8
        $region16: #{tpu_custom_call.1} parent=11 // pred_fallthru
          _
      $region12: #{tpu_custom_call.1} parent=5 // pred_fallthru
        _
      %p170 = scmp.lt.s32.totalorder %s14, 2
      // Predicated region
      $region17: #{tpu_custom_call.1} parent=5 // pred_check
        %p171 = pneg %p170
      $region18: #{tpu_custom_call.1} parent=5 // pred_check_branch
        %173 = sbr.rel (%p171) target = $region20
      $region19: #{tpu_custom_call.1} parent=5 // pred_region
        // Predicated region
        $region21: #{tpu_custom_call.1} parent=19 // pred_check
          %p174 = pneg %p57
        $region22: #{tpu_custom_call.1} parent=19 // pred_check_branch
          %176 = sbr.rel (%p174) target = $region24
        $region23: #{tpu_custom_call.1} parent=19 // pred_region
          %s177 = sand.u32 %s47, 1
          %s178 = scalar_lea.sflag [#allocation4], %s177
          %s179 = sand.u32 %s47, 1
          %s180 = smul.addr %s179, 1024
          %s181 = scalar_lea.vmem [#allocation3], %s180
          %s182 = sadd.s32 %s22, %s23
          %s183 = smul.u32 8, %s182
          %s185 = ssub.s32 16384, 16384
          %186 = vsyncadd %s178, %s185
          %s187 = smul.addr %s21, 128
          %s188 = sadd.s32 %s183, %s187
          %s189 = smul.addr %s188, 128
          %s190 = scalar_lea.hbm %s0, %s189
          %s191 = sshll.u32 %s181, 4
          %s192 = int_to_ptr.vmem [resolvable:$true] %s191
          %197 = dma.hbm_to_vmem [thread:$0]  %s190, 16384, %s192, %s178, 1024, 1024, 64
        $region24: #{tpu_custom_call.1} parent=19 // pred_fallthru
          _
      $region20: #{tpu_custom_call.1} parent=5 // pred_fallthru
        _
      %p198 = scmp.le.s32.totalorder 1, %s14
      %p199 = scmp.lt.s32.totalorder %s14, 3
      %p200 = pnand %p198, %p199
      %p201 = pneg %p200
      // Predicated region
      $region25: #{tpu_custom_call.1} parent=5 // pred_check
        _
      $region26: #{tpu_custom_call.1} parent=5 // pred_check_branch
        %203 = sbr.rel (%p200) target = $region28
      $region27: #{tpu_custom_call.1} parent=5 // pred_region
        %s204 = ssub.s32 %s14, 1
        %s205 = sand.u32 %s50, 1
        %s206 = scalar_lea.sflag [#allocation4], %s205
        %s207 = sand.u32 %s50, 1
        %s208 = smul.addr %s207, 1024
        %s209 = scalar_lea.vmem [#allocation3], %s208
        // Predicated region
        $region29: #{tpu_custom_call.1} parent=27 // pred_check
          %p210 = pneg %p63
        $region30: #{tpu_custom_call.1} parent=27 // pred_check_branch
          %212 = sbr.rel (%p210) target = $region32
        $region31: #{tpu_custom_call.1} parent=27 // pred_region
          %213 = dma.done %s206, 16384
        $region32: #{tpu_custom_call.1} parent=27 // pred_fallthru
          _
        // Predicated region
        $region33: #{tpu_custom_call.1} parent=27 // pred_check
          %p214 = pneg %p84
        $region34: #{tpu_custom_call.1} parent=27 // pred_check_branch
          %216 = sbr.rel (%p214) target = $region36
        $region35: #{tpu_custom_call.1} parent=27 // pred_region
          %217 = dma.done [#allocation6], 384
        $region36: #{tpu_custom_call.1} parent=27 // pred_fallthru
          _
        %s218 = sand.u32 %s50, 1
        %s219 = scalar_lea.sflag [#allocation4], %s218
        %s220 = sand.u32 %s50, 1
        %s221 = smul.addr %s220, 1024
        %s222 = scalar_lea.vmem [#allocation3], %s221
        %p223 = pneg %p63
        %p224 = pneg %p60
        %p225 = pneg %p84
        %p226 = pneg %p81
        %p227 = pneg %p114
        %p228 = pneg %p111
        %s229 = sadd.s32 %s25, %s26
        %s230 = smul.u32 8, %s229
        %p231 = scmp.lt.s32.totalorder %s24, 1
        %s232 = scalar_select %p231, %s24, 1
        %p233 = scmp.lt.s32.totalorder %s230, 7
        %s234 = scalar_select %p233, %s230, 7
        %s235 = smul.addr %s232, 24
        %s236 = sadd.s32 %s234, %s235
        %s237 = smul.addr %s236, 8
        %s238 = scalar_lea.vmem %s2, %s237
        %p239 = pneg %p142
        %p240 = pneg %p139
        %p241 = scmp.lt.s32.totalorder %s24, 1
        %s242 = scalar_select %p241, %s24, 1
        %p243 = scmp.lt.s32.totalorder %s25, 0
        %s244 = scalar_select %p243, %s25, 0
        %s245 = smul.addr %s244, 3
        %s246 = smul.addr %s242, 3
        %s247 = sadd.s32 %s245, %s246
        %s248 = smul.addr %s247, 8
        %s249 = scalar_lea.vmem %s3, %s248
        %s250 = sadd.s32 %s25, %s26
        %s251 = smul.u32 8, %s250
        %s252 = sadd.s32 %s25, %s26
        %s253 = smul.u32 8, %s252
        %p254 = scmp.lt.s32.totalorder %s24, 1
        %s255 = scalar_select %p254, %s24, 1
        %p256 = scmp.lt.s32.totalorder %s253, 7
        %s257 = scalar_select %p256, %s253, 7
        %s258 = smul.addr %s255, 24
        %s259 = sadd.s32 %s257, %s258
        %s260 = smul.addr %s259, 8
        %s261 = scalar_lea.vmem %s2, %s260
        %s262 = sadd.s32 %s25, %s26
        %s263 = smul.u32 8, %s262
        %p264 = scmp.lt.s32.totalorder %s24, 1
        %s265 = scalar_select %p264, %s24, 1
        %p266 = scmp.lt.s32.totalorder %s25, 0
        %s267 = scalar_select %p266, %s25, 0
        %s268 = smul.addr %s267, 3
        %s269 = smul.addr %s265, 3
        %s270 = sadd.s32 %s268, %s269
        %s271 = smul.addr %s270, 8
        %s272 = scalar_lea.vmem %s3, %s271
        %p273 = scmp.eq.s32.totalorder %s26, 0
        // Predicated region
        $region37: #{tpu_custom_call.1} parent=27 // pred_check
          %p274 = pneg %p273
        $region38: #{tpu_custom_call.1} parent=27 // pred_check_branch
          %276 = sbr.rel (%p274) target = $region40
        $region39: #{tpu_custom_call.1} parent=27 // pred_region
          %277 = vst [vmem:[#allocation2] sm:$0xff] 0.0
          %278 = vst [vmem:[#allocation2 + $0x8] sm:$0xff] 0.0
          %279 = vst [vmem:[#allocation2 + $0x10] sm:$0x7] 0.0
        $region40: #{tpu_custom_call.1} parent=27 // pred_fallthru
          _
        %v280 = vld [vmem:[%s209] sm:$0xff]
        %v281 = vld [vmem:[%s209 + $0x8] sm:$0xff]
        %v282 = vld [vmem:[%s209 + $0x10] sm:$0xff]
        %v283 = vld [vmem:[%s209 + $0x18] sm:$0xff]
        %v284 = vld [vmem:[%s209 + $0x20] sm:$0xff]
        %v285 = vld [vmem:[%s209 + $0x28] sm:$0xff]
        %v286 = vld [vmem:[%s209 + $0x30] sm:$0xff]
        %v287 = vld [vmem:[%s209 + $0x38] sm:$0xff]
        %v288 = vld [vmem:[%s209 + $0x40] sm:$0xff]
        %v289 = vld [vmem:[%s209 + $0x48] sm:$0xff]
        %v290 = vld [vmem:[%s209 + $0x50] sm:$0xff]
        %v291 = vld [vmem:[%s209 + $0x58] sm:$0xff]
        %v292 = vld [vmem:[%s209 + $0x60] sm:$0xff]
        %v293 = vld [vmem:[%s209 + $0x68] sm:$0xff]
        %v294 = vld [vmem:[%s209 + $0x70] sm:$0xff]
        %v295 = vld [vmem:[%s209 + $0x78] sm:$0xff]
        %v296 = vld [vmem:[%s209 + $0x80] sm:$0xff]
        %v297 = vld [vmem:[%s209 + $0x88] sm:$0xff]
        %v298 = vld [vmem:[%s209 + $0x90] sm:$0xff]
        %v299 = vld [vmem:[%s209 + $0x98] sm:$0xff]
        %v300 = vld [vmem:[%s209 + $0xa0] sm:$0xff]
        %v301 = vld [vmem:[%s209 + $0xa8] sm:$0xff]
        %v302 = vld [vmem:[%s209 + $0xb0] sm:$0xff]
        %v303 = vld [vmem:[%s209 + $0xb8] sm:$0xff]
        %v304 = vld [vmem:[%s209 + $0xc0] sm:$0xff]
        %v305 = vld [vmem:[%s209 + $0xc8] sm:$0xff]
        %v306 = vld [vmem:[%s209 + $0xd0] sm:$0xff]
        %v307 = vld [vmem:[%s209 + $0xd8] sm:$0xff]
        %v308 = vld [vmem:[%s209 + $0xe0] sm:$0xff]
        %v309 = vld [vmem:[%s209 + $0xe8] sm:$0xff]
        %v310 = vld [vmem:[%s209 + $0xf0] sm:$0xff]
        %v311 = vld [vmem:[%s209 + $0xf8] sm:$0xff]
        %v312 = vld [vmem:[%s209 + $0x100] sm:$0xff]
        %v313 = vld [vmem:[%s209 + $0x108] sm:$0xff]
        %v314 = vld [vmem:[%s209 + $0x110] sm:$0xff]
        %v315 = vld [vmem:[%s209 + $0x118] sm:$0xff]
        %v316 = vld [vmem:[%s209 + $0x120] sm:$0xff]
        %v317 = vld [vmem:[%s209 + $0x128] sm:$0xff]
        %v318 = vld [vmem:[%s209 + $0x130] sm:$0xff]
        %v319 = vld [vmem:[%s209 + $0x138] sm:$0xff]
        %v320 = vld [vmem:[%s209 + $0x140] sm:$0xff]
        %v321 = vld [vmem:[%s209 + $0x148] sm:$0xff]
        %v322 = vld [vmem:[%s209 + $0x150] sm:$0xff]
        %v323 = vld [vmem:[%s209 + $0x158] sm:$0xff]
        %v324 = vld [vmem:[%s209 + $0x160] sm:$0xff]
        %v325 = vld [vmem:[%s209 + $0x168] sm:$0xff]
        %v326 = vld [vmem:[%s209 + $0x170] sm:$0xff]
        %v327 = vld [vmem:[%s209 + $0x178] sm:$0xff]
        %v328 = vld [vmem:[%s209 + $0x180] sm:$0xff]
        %v329 = vld [vmem:[%s209 + $0x188] sm:$0xff]
        %v330 = vld [vmem:[%s209 + $0x190] sm:$0xff]
        %v331 = vld [vmem:[%s209 + $0x198] sm:$0xff]
        %v332 = vld [vmem:[%s209 + $0x1a0] sm:$0xff]
        %v333 = vld [vmem:[%s209 + $0x1a8] sm:$0xff]
        %v334 = vld [vmem:[%s209 + $0x1b0] sm:$0xff]
        %v335 = vld [vmem:[%s209 + $0x1b8] sm:$0xff]
        %v336 = vld [vmem:[%s209 + $0x1c0] sm:$0xff]
        %v337 = vld [vmem:[%s209 + $0x1c8] sm:$0xff]
        %v338 = vld [vmem:[%s209 + $0x1d0] sm:$0xff]
        %v339 = vld [vmem:[%s209 + $0x1d8] sm:$0xff]
        %v340 = vld [vmem:[%s209 + $0x1e0] sm:$0xff]
        %v341 = vld [vmem:[%s209 + $0x1e8] sm:$0xff]
        %v342 = vld [vmem:[%s209 + $0x1f0] sm:$0xff]
        %v343 = vld [vmem:[%s209 + $0x1f8] sm:$0xff]
        %v344 = vld [vmem:[%s209 + $0x200] sm:$0xff]
        %v345 = vld [vmem:[%s209 + $0x208] sm:$0xff]
        %v346 = vld [vmem:[%s209 + $0x210] sm:$0xff]
        %v347 = vld [vmem:[%s209 + $0x218] sm:$0xff]
        %v348 = vld [vmem:[%s209 + $0x220] sm:$0xff]
        %v349 = vld [vmem:[%s209 + $0x228] sm:$0xff]
        %v350 = vld [vmem:[%s209 + $0x230] sm:$0xff]
        %v351 = vld [vmem:[%s209 + $0x238] sm:$0xff]
        %v352 = vld [vmem:[%s209 + $0x240] sm:$0xff]
        %v353 = vld [vmem:[%s209 + $0x248] sm:$0xff]
        %v354 = vld [vmem:[%s209 + $0x250] sm:$0xff]
        %v355 = vld [vmem:[%s209 + $0x258] sm:$0xff]
        %v356 = vld [vmem:[%s209 + $0x260] sm:$0xff]
        %v357 = vld [vmem:[%s209 + $0x268] sm:$0xff]
        %v358 = vld [vmem:[%s209 + $0x270] sm:$0xff]
        %v359 = vld [vmem:[%s209 + $0x278] sm:$0xff]
        %v360 = vld [vmem:[%s209 + $0x280] sm:$0xff]
        %v361 = vld [vmem:[%s209 + $0x288] sm:$0xff]
        %v362 = vld [vmem:[%s209 + $0x290] sm:$0xff]
        %v363 = vld [vmem:[%s209 + $0x298] sm:$0xff]
        %v364 = vld [vmem:[%s209 + $0x2a0] sm:$0xff]
        %v365 = vld [vmem:[%s209 + $0x2a8] sm:$0xff]
        %v366 = vld [vmem:[%s209 + $0x2b0] sm:$0xff]
        %v367 = vld [vmem:[%s209 + $0x2b8] sm:$0xff]
        %v368 = vld [vmem:[%s209 + $0x2c0] sm:$0xff]
        %v369 = vld [vmem:[%s209 + $0x2c8] sm:$0xff]
        %v370 = vld [vmem:[%s209 + $0x2d0] sm:$0xff]
        %v371 = vld [vmem:[%s209 + $0x2d8] sm:$0xff]
        %v372 = vld [vmem:[%s209 + $0x2e0] sm:$0xff]
        %v373 = vld [vmem:[%s209 + $0x2e8] sm:$0xff]
        %v374 = vld [vmem:[%s209 + $0x2f0] sm:$0xff]
        %v375 = vld [vmem:[%s209 + $0x2f8] sm:$0xff]
        %v376 = vld [vmem:[%s209 + $0x300] sm:$0xff]
        %v377 = vld [vmem:[%s209 + $0x308] sm:$0xff]
        %v378 = vld [vmem:[%s209 + $0x310] sm:$0xff]
        %v379 = vld [vmem:[%s209 + $0x318] sm:$0xff]
        %v380 = vld [vmem:[%s209 + $0x320] sm:$0xff]
        %v381 = vld [vmem:[%s209 + $0x328] sm:$0xff]
        %v382 = vld [vmem:[%s209 + $0x330] sm:$0xff]
        %v383 = vld [vmem:[%s209 + $0x338] sm:$0xff]
        %v384 = vld [vmem:[%s209 + $0x340] sm:$0xff]
        %v385 = vld [vmem:[%s209 + $0x348] sm:$0xff]
        %v386 = vld [vmem:[%s209 + $0x350] sm:$0xff]
        %v387 = vld [vmem:[%s209 + $0x358] sm:$0xff]
        %v388 = vld [vmem:[%s209 + $0x360] sm:$0xff]
        %v389 = vld [vmem:[%s209 + $0x368] sm:$0xff]
        %v390 = vld [vmem:[%s209 + $0x370] sm:$0xff]
        %v391 = vld [vmem:[%s209 + $0x378] sm:$0xff]
        %v392 = vld [vmem:[%s209 + $0x380] sm:$0xff]
        %v393 = vld [vmem:[%s209 + $0x388] sm:$0xff]
        %v394 = vld [vmem:[%s209 + $0x390] sm:$0xff]
        %v395 = vld [vmem:[%s209 + $0x398] sm:$0xff]
        %v396 = vld [vmem:[%s209 + $0x3a0] sm:$0xff]
        %v397 = vld [vmem:[%s209 + $0x3a8] sm:$0xff]
        %v398 = vld [vmem:[%s209 + $0x3b0] sm:$0xff]
        %v399 = vld [vmem:[%s209 + $0x3b8] sm:$0xff]
        %v400 = vld [vmem:[%s209 + $0x3c0] sm:$0xff]
        %v401 = vld [vmem:[%s209 + $0x3c8] sm:$0xff]
        %v402 = vld [vmem:[%s209 + $0x3d0] sm:$0xff]
        %v403 = vld [vmem:[%s209 + $0x3d8] sm:$0xff]
        %v404 = vld [vmem:[%s209 + $0x3e0] sm:$0xff]
        %v405 = vld [vmem:[%s209 + $0x3e8] sm:$0xff]
        %v406 = vld [vmem:[%s209 + $0x3f0] sm:$0xff]
        %v407 = vld [vmem:[%s209 + $0x3f8] sm:$0xff]
        %v408 = vld [vmem:[#allocation5] sm:$0xff]
        %v409 = vld [vmem:[#allocation5 + $0x8] sm:$0xff]
        %v410 = vld [vmem:[#allocation5 + $0x10] sm:$0x7]
        %411 = vmatprep.subr.mxu0 %v281
        %412 = vmatpush1.msra.mxu0 %v280
        %413 = vmatprep.subr.mxu0 %v289
        %414 = vmatpush1.msra.mxu0 %v288
        %415 = vmatprep.subr.mxu0 %v297
        %416 = vmatpush1.msra.mxu0 %v296
        %417 = vmatprep.subr.mxu0 %v305
        %418 = vmatpush1.msra.mxu0 %v304
        %419 = vmatprep.subr.mxu0 %v313
        %420 = vmatpush1.msra.mxu0 %v312
        %421 = vmatprep.subr.mxu0 %v321
        %422 = vmatpush1.msra.mxu0 %v320
        %423 = vmatprep.subr.mxu0 %v329
        %424 = vmatpush1.msra.mxu0 %v328
        %425 = vmatprep.subr.mxu0 %v337
        %426 = vmatpush1.msra.mxu0 %v336
        %427 = vmatprep.subr.mxu0 %v345
        %428 = vmatpush1.msra.mxu0 %v344
        %429 = vmatprep.subr.mxu0 %v353
        %430 = vmatpush1.msra.mxu0 %v352
        %431 = vmatprep.subr.mxu0 %v361
        %432 = vmatpush1.msra.mxu0 %v360
        %433 = vmatprep.subr.mxu0 %v369
        %434 = vmatpush1.msra.mxu0 %v368
        %435 = vmatprep.subr.mxu0 %v377
        %436 = vmatpush1.msra.mxu0 %v376
        %437 = vmatprep.subr.mxu0 %v385
        %438 = vmatpush1.msra.mxu0 %v384
        %439 = vmatprep.subr.mxu0 %v393
        %440 = vmatpush1.msra.mxu0 %v392
        %441 = vmatprep.subr.mxu0 %v401
        %442 = vmatpush1.msra.mxu0 %v400
        %443 = vmatprep.subr.mxu0 0.0
        %444 = vmatpush1.msra.mxu0 0.0
        %445 = vmatprep.subr.mxu0 0.0
        %446 = vmatpush1.msra.mxu0 0.0
        %447 = vmatprep.subr.mxu0 0.0
        %448 = vmatpush1.msra.mxu0 0.0
        %449 = vmatprep.subr.mxu0 0.0
        %450 = vmatpush1.msra.mxu0 0.0
        %451 = vmatprep.subr.mxu0 0.0
        %452 = vmatpush1.msra.mxu0 0.0
        %453 = vmatprep.subr.mxu0 0.0
        %454 = vmatpush1.msra.mxu0 0.0
        %455 = vmatprep.subr.mxu0 0.0
        %456 = vmatpush1.msra.mxu0 0.0
        %457 = vmatprep.subr.mxu0 0.0
        %458 = vmatpush1.msra.mxu0 0.0
        %459 = vmatprep.subr.mxu0 0.0
        %460 = vmatpush1.msra.mxu0 0.0
        %461 = vmatprep.subr.mxu0 0.0
        %462 = vmatpush1.msra.mxu0 0.0
        %463 = vmatprep.subr.mxu0 0.0
        %464 = vmatpush1.msra.mxu0 0.0
        %465 = vmatprep.subr.mxu0 0.0
        %466 = vmatpush1.msra.mxu0 0.0
        %467 = vmatprep.subr.mxu0 0.0
        %468 = vmatpush1.msra.mxu0 0.0
        %469 = vmatprep.subr.mxu0 0.0
        %470 = vmatpush1.msra.mxu0 0.0
        %471 = vmatprep.subr.mxu0 0.0
        %472 = vmatpush1.msra.mxu0 0.0
        %473 = vmatprep.subr.mxu0 0.0
        %474 = vmatpush1.msra.mxu0 0.0
        %475 = vmatprep.mubr.f32.mxu0 0.0
        %476 = vmatmul.mubr.f32.gmra.mrb[0].mxu0 %v408
        %v477 = vpop.f32.mrb[0].mxu0
        %v478 = vadd.f32 0.0, %v477
        %v479 = vpop.f32.mrb[0].mxu0
        %v480 = vadd.f32 0.0, %v479
        %481 = vmatprep.mubr.f32.mxu0 0.0
        %482 = vmatmul.mubr.f32.gmra.mrb[0].mxu0 %v409
        %v483 = vpop.f32.mrb[0].mxu0
        %v484 = vadd.f32 0.0, %v483
        %v485 = vpop.f32.mrb[0].mxu0
        %v486 = vadd.f32 0.0, %v485
        %487 = vmatprep.mubr.f32.mxu0 0.0
        %488 = vmatmul.mubr.f32.gmra.mrb[0].mxu0 %v410
        %v489 = vpop.f32.mrb[0].mxu0
        %v490 = vadd.f32 0.0, %v489
        %v491 = vpop.f32.mrb[0].mxu0
        %v492 = vadd.f32 0.0, %v491
        %493 = vdwg.mxu0
        %494 = vmatprep.subr.mxu0 %v283
        %495 = vmatpush1.msra.mxu0 %v282
        %496 = vmatprep.subr.mxu0 %v291
        %497 = vmatpush1.msra.mxu0 %v290
        %498 = vmatprep.subr.mxu0 %v299
        %499 = vmatpush1.msra.mxu0 %v298
        %500 = vmatprep.subr.mxu0 %v307
        %501 = vmatpush1.msra.mxu0 %v306
        %502 = vmatprep.subr.mxu0 %v315
        %503 = vmatpush1.msra.mxu0 %v314
        %504 = vmatprep.subr.mxu0 %v323
        %505 = vmatpush1.msra.mxu0 %v322
        %506 = vmatprep.subr.mxu0 %v331
        %507 = vmatpush1.msra.mxu0 %v330
        %508 = vmatprep.subr.mxu0 %v339
        %509 = vmatpush1.msra.mxu0 %v338
        %510 = vmatprep.subr.mxu0 %v347
        %511 = vmatpush1.msra.mxu0 %v346
        %512 = vmatprep.subr.mxu0 %v355
        %513 = vmatpush1.msra.mxu0 %v354
        %514 = vmatprep.subr.mxu0 %v363
        %515 = vmatpush1.msra.mxu0 %v362
        %516 = vmatprep.subr.mxu0 %v371
        %517 = vmatpush1.msra.mxu0 %v370
        %518 = vmatprep.subr.mxu0 %v379
        %519 = vmatpush1.msra.mxu0 %v378
        %520 = vmatprep.subr.mxu0 %v387
        %521 = vmatpush1.msra.mxu0 %v386
        %522 = vmatprep.subr.mxu0 %v395
        %523 = vmatpush1.msra.mxu0 %v394
        %524 = vmatprep.subr.mxu0 %v403
        %525 = vmatpush1.msra.mxu0 %v402
        %526 = vmatprep.subr.mxu0 0.0
        %527 = vmatpush1.msra.mxu0 0.0
        %528 = vmatprep.subr.mxu0 0.0
        %529 = vmatpush1.msra.mxu0 0.0
        %530 = vmatprep.subr.mxu0 0.0
        %531 = vmatpush1.msra.mxu0 0.0
        %532 = vmatprep.subr.mxu0 0.0
        %533 = vmatpush1.msra.mxu0 0.0
        %534 = vmatprep.subr.mxu0 0.0
        %535 = vmatpush1.msra.mxu0 0.0
        %536 = vmatprep.subr.mxu0 0.0
        %537 = vmatpush1.msra.mxu0 0.0
        %538 = vmatprep.subr.mxu0 0.0
        %539 = vmatpush1.msra.mxu0 0.0
        %540 = vmatprep.subr.mxu0 0.0
        %541 = vmatpush1.msra.mxu0 0.0
        %542 = vmatprep.subr.mxu0 0.0
        %543 = vmatpush1.msra.mxu0 0.0
        %544 = vmatprep.subr.mxu0 0.0
        %545 = vmatpush1.msra.mxu0 0.0
        %546 = vmatprep.subr.mxu0 0.0
        %547 = vmatpush1.msra.mxu0 0.0
        %548 = vmatprep.subr.mxu0 0.0
        %549 = vmatpush1.msra.mxu0 0.0
        %550 = vmatprep.subr.mxu0 0.0
        %551 = vmatpush1.msra.mxu0 0.0
        %552 = vmatprep.subr.mxu0 0.0
        %553 = vmatpush1.msra.mxu0 0.0
        %554 = vmatprep.subr.mxu0 0.0
        %555 = vmatpush1.msra.mxu0 0.0
        %556 = vmatprep.subr.mxu0 0.0
        %557 = vmatpush1.msra.mxu0 0.0
        %558 = vmatprep.mubr.f32.mxu0 0.0
        %559 = vmatmul.mubr.f32.gmra.mrb[0].mxu0 %v408
        %v560 = vpop.f32.mrb[0].mxu0
        %v561 = vadd.f32 0.0, %v560
        %v562 = vpop.f32.mrb[0].mxu0
        %v563 = vadd.f32 0.0, %v562
        %564 = vmatprep.mubr.f32.mxu0 0.0
        %565 = vmatmul.mubr.f32.gmra.mrb[0].mxu0 %v409
        %v566 = vpop.f32.mrb[0].mxu0
        %v567 = vadd.f32 0.0, %v566
        %v568 = vpop.f32.mrb[0].mxu0
        %v569 = vadd.f32 0.0, %v568
        %570 = vmatprep.mubr.f32.mxu0 0.0
        %571 = vmatmul.mubr.f32.gmra.mrb[0].mxu0 %v410
        %v572 = vpop.f32.mrb[0].mxu0
        %v573 = vadd.f32 0.0, %v572
        %v574 = vpop.f32.mrb[0].mxu0
        %v575 = vadd.f32 0.0, %v574
        %576 = vdwg.mxu0
        %577 = vmatprep.subr.mxu0 %v285
        %578 = vmatpush1.msra.mxu0 %v284
        %579 = vmatprep.subr.mxu0 %v293
        %580 = vmatpush1.msra.mxu0 %v292
        %581 = vmatprep.subr.mxu0 %v301
        %582 = vmatpush1.msra.mxu0 %v300
        %583 = vmatprep.subr.mxu0 %v309
        %584 = vmatpush1.msra.mxu0 %v308
        %585 = vmatprep.subr.mxu0 %v317
        %586 = vmatpush1.msra.mxu0 %v316
        %587 = vmatprep.subr.mxu0 %v325
        %588 = vmatpush1.msra.mxu0 %v324
        %589 = vmatprep.subr.mxu0 %v333
        %590 = vmatpush1.msra.mxu0 %v332
        %591 = vmatprep.subr.mxu0 %v341
        %592 = vmatpush1.msra.mxu0 %v340
        %593 = vmatprep.subr.mxu0 %v349
        %594 = vmatpush1.msra.mxu0 %v348
        %595 = vmatprep.subr.mxu0 %v357
        %596 = vmatpush1.msra.mxu0 %v356
        %597 = vmatprep.subr.mxu0 %v365
        %598 = vmatpush1.msra.mxu0 %v364
        %599 = vmatprep.subr.mxu0 %v373
        %600 = vmatpush1.msra.mxu0 %v372
        %601 = vmatprep.subr.mxu0 %v381
        %602 = vmatpush1.msra.mxu0 %v380
        %603 = vmatprep.subr.mxu0 %v389
        %604 = vmatpush1.msra.mxu0 %v388
        %605 = vmatprep.subr.mxu0 %v397
        %606 = vmatpush1.msra.mxu0 %v396
        %607 = vmatprep.subr.mxu0 %v405
        %608 = vmatpush1.msra.mxu0 %v404
        %609 = vmatprep.subr.mxu0 0.0
        %610 = vmatpush1.msra.mxu0 0.0
        %611 = vmatprep.subr.mxu0 0.0
        %612 = vmatpush1.msra.mxu0 0.0
        %613 = vmatprep.subr.mxu0 0.0
        %614 = vmatpush1.msra.mxu0 0.0
        %615 = vmatprep.subr.mxu0 0.0
        %616 = vmatpush1.msra.mxu0 0.0
        %617 = vmatprep.subr.mxu0 0.0
        %618 = vmatpush1.msra.mxu0 0.0
        %619 = vmatprep.subr.mxu0 0.0
        %620 = vmatpush1.msra.mxu0 0.0
        %621 = vmatprep.subr.mxu0 0.0
        %622 = vmatpush1.msra.mxu0 0.0
        %623 = vmatprep.subr.mxu0 0.0
        %624 = vmatpush1.msra.mxu0 0.0
        %625 = vmatprep.subr.mxu0 0.0
        %626 = vmatpush1.msra.mxu0 0.0
        %627 = vmatprep.subr.mxu0 0.0
        %628 = vmatpush1.msra.mxu0 0.0
        %629 = vmatprep.subr.mxu0 0.0
        %630 = vmatpush1.msra.mxu0 0.0
        %631 = vmatprep.subr.mxu0 0.0
        %632 = vmatpush1.msra.mxu0 0.0
        %633 = vmatprep.subr.mxu0 0.0
        %634 = vmatpush1.msra.mxu0 0.0
        %635 = vmatprep.subr.mxu0 0.0
        %636 = vmatpush1.msra.mxu0 0.0
        %637 = vmatprep.subr.mxu0 0.0
        %638 = vmatpush1.msra.mxu0 0.0
        %639 = vmatprep.subr.mxu0 0.0
        %640 = vmatpush1.msra.mxu0 0.0
        %641 = vmatprep.mubr.f32.mxu0 0.0
        %642 = vmatmul.mubr.f32.gmra.mrb[0].mxu0 %v408
        %v643 = vpop.f32.mrb[0].mxu0
        %v644 = vadd.f32 0.0, %v643
        %v645 = vpop.f32.mrb[0].mxu0
        %v646 = vadd.f32 0.0, %v645
        %647 = vmatprep.mubr.f32.mxu0 0.0
        %648 = vmatmul.mubr.f32.gmra.mrb[0].mxu0 %v409
        %v649 = vpop.f32.mrb[0].mxu0
        %v650 = vadd.f32 0.0, %v649
        %v651 = vpop.f32.mrb[0].mxu0
        %v652 = vadd.f32 0.0, %v651
        %653 = vmatprep.mubr.f32.mxu0 0.0
        %654 = vmatmul.mubr.f32.gmra.mrb[0].mxu0 %v410
        %v655 = vpop.f32.mrb[0].mxu0
        %v656 = vadd.f32 0.0, %v655
        %v657 = vpop.f32.mrb[0].mxu0
        %v658 = vadd.f32 0.0, %v657
        %659 = vdwg.mxu0
        %660 = vmatprep.subr.mxu0 %v287
        %661 = vmatpush1.msra.mxu0 %v286
        %662 = vmatprep.subr.mxu0 %v295
        %663 = vmatpush1.msra.mxu0 %v294
        %664 = vmatprep.subr.mxu0 %v303
        %665 = vmatpush1.msra.mxu0 %v302
        %666 = vmatprep.subr.mxu0 %v311
        %667 = vmatpush1.msra.mxu0 %v310
        %668 = vmatprep.subr.mxu0 %v319
        %669 = vmatpush1.msra.mxu0 %v318
        %670 = vmatprep.subr.mxu0 %v327
        %671 = vmatpush1.msra.mxu0 %v326
        %672 = vmatprep.subr.mxu0 %v335
        %673 = vmatpush1.msra.mxu0 %v334
        %674 = vmatprep.subr.mxu0 %v343
        %675 = vmatpush1.msra.mxu0 %v342
        %676 = vmatprep.subr.mxu0 %v351
        %677 = vmatpush1.msra.mxu0 %v350
        %678 = vmatprep.subr.mxu0 %v359
        %679 = vmatpush1.msra.mxu0 %v358
        %680 = vmatprep.subr.mxu0 %v367
        %681 = vmatpush1.msra.mxu0 %v366
        %682 = vmatprep.subr.mxu0 %v375
        %683 = vmatpush1.msra.mxu0 %v374
        %684 = vmatprep.subr.mxu0 %v383
        %685 = vmatpush1.msra.mxu0 %v382
        %686 = vmatprep.subr.mxu0 %v391
        %687 = vmatpush1.msra.mxu0 %v390
        %688 = vmatprep.subr.mxu0 %v399
        %689 = vmatpush1.msra.mxu0 %v398
        %690 = vmatprep.subr.mxu0 %v407
        %691 = vmatpush1.msra.mxu0 %v406
        %692 = vmatprep.subr.mxu0 0.0
        %693 = vmatpush1.msra.mxu0 0.0
        %694 = vmatprep.subr.mxu0 0.0
        %695 = vmatpush1.msra.mxu0 0.0
        %696 = vmatprep.subr.mxu0 0.0
        %697 = vmatpush1.msra.mxu0 0.0
        %698 = vmatprep.subr.mxu0 0.0
        %699 = vmatpush1.msra.mxu0 0.0
        %700 = vmatprep.subr.mxu0 0.0
        %701 = vmatpush1.msra.mxu0 0.0
        %702 = vmatprep.subr.mxu0 0.0
        %703 = vmatpush1.msra.mxu0 0.0
        %704 = vmatprep.subr.mxu0 0.0
        %705 = vmatpush1.msra.mxu0 0.0
        %706 = vmatprep.subr.mxu0 0.0
        %707 = vmatpush1.msra.mxu0 0.0
        %708 = vmatprep.subr.mxu0 0.0
        %709 = vmatpush1.msra.mxu0 0.0
        %710 = vmatprep.subr.mxu0 0.0
        %711 = vmatpush1.msra.mxu0 0.0
        %712 = vmatprep.subr.mxu0 0.0
        %713 = vmatpush1.msra.mxu0 0.0
        %714 = vmatprep.subr.mxu0 0.0
        %715 = vmatpush1.msra.mxu0 0.0
        %716 = vmatprep.subr.mxu0 0.0
        %717 = vmatpush1.msra.mxu0 0.0
        %718 = vmatprep.subr.mxu0 0.0
        %719 = vmatpush1.msra.mxu0 0.0
        %720 = vmatprep.subr.mxu0 0.0
        %721 = vmatpush1.msra.mxu0 0.0
        %722 = vmatprep.subr.mxu0 0.0
        %723 = vmatpush1.msra.mxu0 0.0
        %724 = vmatprep.mubr.f32.mxu0 0.0
        %725 = vmatmul.mubr.f32.gmra.mrb[0].mxu0 %v408
        %v726 = vpop.f32.mrb[0].mxu0
        %v727 = vadd.f32 0.0, %v726
        %v728 = vpop.f32.mrb[0].mxu0
        %v729 = vadd.f32 0.0, %v728
        %730 = vmatprep.mubr.f32.mxu0 0.0
        %731 = vmatmul.mubr.f32.gmra.mrb[0].mxu0 %v409
        %v732 = vpop.f32.mrb[0].mxu0
        %v733 = vadd.f32 0.0, %v732
        %v734 = vpop.f32.mrb[0].mxu0
        %v735 = vadd.f32 0.0, %v734
        %736 = vmatprep.mubr.f32.mxu0 0.0
        %737 = vmatmul.mubr.f32.gmra.mrb[0].mxu0 %v410
        %v738 = vpop.f32.mrb[0].mxu0
        %v739 = vadd.f32 0.0, %v738
        %v740 = vpop.f32.mrb[0].mxu0
        %v741 = vadd.f32 0.0, %v740
        %742 = vdwg.mxu0
        %743 = vst [vmem:[%s261] sm:$0xff] %v478
        %744 = vst [vmem:[%s261 + $0x8] sm:$0xff] %v480
        %745 = vst [vmem:[%s261 + $0x10] sm:$0xff] %v561
        %746 = vst [vmem:[%s261 + $0x18] sm:$0xff] %v563
        %747 = vst [vmem:[%s261 + $0x20] sm:$0xff] %v644
        %748 = vst [vmem:[%s261 + $0x28] sm:$0xff] %v646
        %749 = vst [vmem:[%s261 + $0x30] sm:$0xff] %v727
        %750 = vst [vmem:[%s261 + $0x38] sm:$0xff] %v729
        %751 = vst [vmem:[%s261 + $0x40] sm:$0xff] %v484
        %752 = vst [vmem:[%s261 + $0x48] sm:$0xff] %v486
        %753 = vst [vmem:[%s261 + $0x50] sm:$0xff] %v567
        %754 = vst [vmem:[%s261 + $0x58] sm:$0xff] %v569
        %755 = vst [vmem:[%s261 + $0x60] sm:$0xff] %v650
        %756 = vst [vmem:[%s261 + $0x68] sm:$0xff] %v652
        %757 = vst [vmem:[%s261 + $0x70] sm:$0xff] %v733
        %758 = vst [vmem:[%s261 + $0x78] sm:$0xff] %v735
        %759 = vst [vmem:[%s261 + $0x80] sm:$0x7] %v490
        %760 = vst [vmem:[%s261 + $0x88] sm:$0x7] %v492
        %761 = vst [vmem:[%s261 + $0x90] sm:$0x7] %v573
        %762 = vst [vmem:[%s261 + $0x98] sm:$0x7] %v575
        %763 = vst [vmem:[%s261 + $0xa0] sm:$0x7] %v656
        %764 = vst [vmem:[%s261 + $0xa8] sm:$0x7] %v658
        %765 = vst [vmem:[%s261 + $0xb0] sm:$0x7] %v739
        %766 = vst [vmem:[%s261 + $0xb8] sm:$0x7] %v741
        %v767 = vld [vmem:[#allocation2] sm:$0xff]
        %v768 = vld [vmem:[#allocation2 + $0x8] sm:$0xff]
        %v769 = vld [vmem:[#allocation2 + $0x10] sm:$0x7]
        %v770 = vadd.f32 %v478, %v480
        %v771 = vadd.f32 %v484, %v486
        %v772 = vadd.f32 %v490, %v492
        %v773 = vadd.f32 %v770, %v561
        %v774 = vadd.f32 %v771, %v567
        %v775 = vadd.f32 %v772, %v573
        %v776 = vadd.f32 %v773, %v563
        %v777 = vadd.f32 %v774, %v569
        %v778 = vadd.f32 %v775, %v575
        %v779 = vadd.f32 %v776, %v644
        %v780 = vadd.f32 %v777, %v650
        %v781 = vadd.f32 %v778, %v656
        %v782 = vadd.f32 %v779, %v646
        %v783 = vadd.f32 %v780, %v652
        %v784 = vadd.f32 %v781, %v658
        %v785 = vadd.f32 %v782, %v727
        %v786 = vadd.f32 %v783, %v733
        %v787 = vadd.f32 %v784, %v739
        %v788 = vadd.f32 %v785, %v729
        %v789 = vadd.f32 %v786, %v735
        %v790 = vadd.f32 %v787, %v741
        %v791 = vadd.f32 %v767, %v788
        %v792 = vadd.f32 %v768, %v789
        %v793 = vadd.f32 %v769, %v790
        %794 = vst [vmem:[#allocation2] sm:$0xff] %v791
        %795 = vst [vmem:[#allocation2 + $0x8] sm:$0xff] %v792
        %796 = vst [vmem:[#allocation2 + $0x10] sm:$0x7] %v793
        // Predicated region
        $region41: #{tpu_custom_call.1} parent=27 // pred_check
          %p797 = pneg %p273
        $region42: #{tpu_custom_call.1} parent=27 // pred_check_branch
          %799 = sbr.rel (%p797) target = $region44
        $region43: #{tpu_custom_call.1} parent=27 // pred_region
          %v800 = vld [vmem:[#allocation2] sm:$0xff]
          %v801 = vld [vmem:[#allocation2 + $0x8] sm:$0xff]
          %v802 = vld [vmem:[#allocation2 + $0x10] sm:$0x7]
          %803 = vadd.xlane.f32.xlu0 %v800
          %v804 = vpop.xlane.xlu0 %803
          %805 = vadd.xlane.f32.xlu0 %v801
          %v806 = vpop.xlane.xlu0 %805
          %vm807 = vcmask 1042432
          %v808 = vsel %vm807, %v802, 0.0
          %809 = vadd.xlane.f32.xlu0 %v808
          %v810 = vpop.xlane.xlu0 %809
          %v811 = vmul.f32 %v804, 0.0009765625
          %v812 = vmul.f32 %v806, 0.0009765625
          %v813 = vmul.f32 %v810, 0.0009765625
          %vm814 = vcmask 7168
          %815 = vst.msk [vmem:[%s272] sm:$0xff] %vm814, %v811
          %816 = vst.msk [vmem:[%s272 + $0x8] sm:$0xff] %vm814, %v812
          %vm817 = vcmask 2048
          %818 = vst.msk [vmem:[%s272 + $0x10] sm:$0x7] %vm817, %v813
        $region44: #{tpu_custom_call.1} parent=27 // pred_fallthru
          _
        %s819 = sadd.s32 %s25, %s26
        %s820 = smul.u32 8, %s819
        %p821 = scmp.lt.s32.totalorder %s24, 1
        %s822 = scalar_select %p821, %s24, 1
        %p823 = scmp.lt.s32.totalorder %s820, 7
        %s824 = scalar_select %p823, %s820, 7
        %s825 = smul.addr %s822, 24
        %s826 = sadd.s32 %s824, %s825
        %s827 = smul.addr %s826, 8
        %s828 = scalar_lea.vmem %s2, %s827
        %p829 = scmp.lt.s32.totalorder %s24, 1
        %s830 = scalar_select %p829, %s24, 1
        %p831 = scmp.lt.s32.totalorder %s25, 0
        %s832 = scalar_select %p831, %s25, 0
        %s833 = smul.addr %s832, 3
        %s834 = smul.addr %s830, 3
        %s835 = sadd.s32 %s833, %s834
        %s836 = smul.addr %s835, 8
        %s837 = scalar_lea.vmem %s3, %s836
        // Predicated region
        $region45: #{tpu_custom_call.1} parent=27 // pred_check
          %p838 = pneg %p111
        $region46: #{tpu_custom_call.1} parent=27 // pred_check_branch
          %840 = sbr.rel (%p838) target = $region48
        $region47: #{tpu_custom_call.1} parent=27 // pred_region
          %s841 = sadd.s32 %s25, %s26
          %s842 = smul.u32 8, %s841
        $region48: #{tpu_custom_call.1} parent=27 // pred_fallthru
          _
        // Predicated region
        $region49: #{tpu_custom_call.1} parent=27 // pred_check
          %p843 = pneg %p139
        $region50: #{tpu_custom_call.1} parent=27 // pred_check_branch
          %845 = sbr.rel (%p843) target = $region52
        $region51: #{tpu_custom_call.1} parent=27 // pred_region
          _
        $region52: #{tpu_custom_call.1} parent=27 // pred_fallthru
          _
      $region28: #{tpu_custom_call.1} parent=5 // pred_fallthru
        _
      %p846 = scmp.le.s32.totalorder 2, %s14
      // Predicated region
      $region53: #{tpu_custom_call.1} parent=5 // pred_check
        %p847 = pneg %p846
      $region54: #{tpu_custom_call.1} parent=5 // pred_check_branch
        %849 = sbr.rel (%p847) target = $region56
      $region55: #{tpu_custom_call.1} parent=5 // pred_region
        %s850 = ssub.s32 %s14, 2
        // Predicated region
        $region57: #{tpu_custom_call.1} parent=55 // pred_check
          %p851 = pneg %p117
        $region58: #{tpu_custom_call.1} parent=55 // pred_check_branch
          %853 = sbr.rel (%p851) target = $region60
        $region59: #{tpu_custom_call.1} parent=55 // pred_region
          %s854 = sadd.s32 %s28, %s29
          %s855 = smul.u32 8, %s854
          %p856 = scmp.lt.s32.totalorder %s27, 1
          %s857 = scalar_select %p856, %s27, 1
          %p858 = scmp.lt.s32.totalorder %s855, 7
          %s859 = scalar_select %p858, %s855, 7
          %s860 = smul.addr %s857, 24
          %s861 = sadd.s32 %s859, %s860
          %s862 = smul.addr %s861, 8
          %s863 = scalar_lea.vmem %s2, %s862
        $region60: #{tpu_custom_call.1} parent=55 // pred_fallthru
          _
        // Predicated region
        $region61: #{tpu_custom_call.1} parent=55 // pred_check
          %p864 = pneg %p145
        $region62: #{tpu_custom_call.1} parent=55 // pred_check_branch
          %866 = sbr.rel (%p864) target = $region64
        $region63: #{tpu_custom_call.1} parent=55 // pred_region
          %p867 = scmp.lt.s32.totalorder %s27, 1
          %s868 = scalar_select %p867, %s27, 1
          %p869 = scmp.lt.s32.totalorder %s28, 0
          %s870 = scalar_select %p869, %s28, 0
          %s871 = smul.addr %s870, 3
          %s872 = smul.addr %s868, 3
          %s873 = sadd.s32 %s871, %s872
          %s874 = smul.addr %s873, 8
          %s875 = scalar_lea.vmem %s3, %s874
        $region64: #{tpu_custom_call.1} parent=55 // pred_fallthru
          _
      $region56: #{tpu_custom_call.1} parent=5 // pred_fallthru
        _
    $region6: #{tpu_custom_call.1} parent=1 // loop_footer
      %s18 = sadd.s32 1, %s14
    $region7: #{tpu_custom_call.1} parent=1 // loop_footer_branch
      %13 = sbr.rel target = $region3
    $region8: #{tpu_custom_call.1} parent=1 // loop_exit
      _
    %876 = vsyncpa [#allocation4], 1
    %s877 = scalar_lea.sflag [#allocation4], 1
    %878 = vsyncpa %s877, 1
    %879 = vsyncpa [#allocation6], 1

</llo_original>
